<compile_context>
chip_gen: v7x
topology: tpu7x:2x2x1
jax: 0.10.0
libtpu: 0.0.40
codegen_flags: <defaults>
</compile_context>

<pallas_src>
import functools

import jax
import jax.numpy as jnp
from jax.experimental import pallas as pl
from jax.experimental.pallas import tpu as pltpu

LANES = 128
SUBLANES = 8
TARGET_TILE_BYTES = 4 * 1024 * 1024  # ~4 MiB input tile; ~8 MiB double-buffered


def _grayloss_partial_kernel(x_ref, o_ref, *, tile_rows, valid_rows, needs_mask):
    i = pl.program_id(0)
    tile = x_ref[...].astype(jnp.float32)          # (tile_rows, 128)
    diff = jnp.abs(tile - 0.5)

    if needs_mask:
        # Rows past the true slab extent are Pallas edge-block padding
        # (undefined values) -> zero their contribution.  VPU-only work,
        # hidden under the HBM stream.
        row_ids = (
            jax.lax.broadcasted_iota(jnp.int32, (tile_rows, LANES), 0)
            + i * tile_rows
        )
        diff = jnp.where(row_ids < valid_rows, diff, 0.0)

    # Fold sublane groups: (tile_rows, 128) -> (tile_rows//8, 8, 128) -> (8, 128).
    # Layout-preserving reshape + leading-axis sum == plain vreg adds on the VPU;
    # the single cross-lane/sublane collapse happens once, in JAX, on a tiny slab.
    o_ref[...] = jnp.sum(
        diff.reshape(tile_rows // SUBLANES, SUBLANES, LANES), axis=0
    )


def gray_loss(x):
    """1 / mean(|x - 0.5|) computed with a Pallas TPU kernel. Returns f32 scalar."""
    n_elements = x.size
    flat = x.reshape(-1)  # native dtype; cast to f32 happens per-tile in-kernel

    # Reshape to a lane-dense (rows, 128) slab with rows a multiple of 8.
    # No copy when n is already a multiple of 1024 (the common case); otherwise
    # pad with 0.5 (contributes 0 to the |x - 0.5| sum).
    chunk = SUBLANES * LANES  # 1024
    padded = pl.cdiv(n_elements, chunk) * chunk
    if padded != n_elements:
        flat = jnp.concatenate(
            [flat, jnp.full((padded - n_elements,), 0.5, flat.dtype)]
        )
    rows = padded // LANES
    slab = flat.reshape(rows, LANES)

    # Multi-MiB tile, clamped to the slab size, multiple of 8 rows.
    bytes_per_row = LANES * slab.dtype.itemsize
    tile_rows = max(
        SUBLANES, (TARGET_TILE_BYTES // bytes_per_row) // SUBLANES * SUBLANES
    )
    tile_rows = min(tile_rows, rows)
    num_tiles = pl.cdiv(rows, tile_rows)
    needs_mask = (rows % tile_rows) != 0  # only traced when an edge block exists

    kernel = functools.partial(
        _grayloss_partial_kernel,
        tile_rows=tile_rows,
        valid_rows=rows,
        needs_mask=needs_mask,
    )

    partials = pl.pallas_call(
        kernel,
        out_shape=jax.ShapeDtypeStruct((num_tiles * SUBLANES, LANES), jnp.float32),
        grid_spec=pltpu.PrefetchScalarGridSpec(
            num_scalar_prefetch=0,
            grid=(num_tiles,),
            in_specs=[pl.BlockSpec((tile_rows, LANES), lambda i: (i, 0))],
            out_specs=pl.BlockSpec((SUBLANES, LANES), lambda i: (i, 0)),
        ),
        compiler_params=pltpu.CompilerParams(
            dimension_semantics=("parallel",),  # independent blocks -> megacore OK
            vmem_limit_bytes=32 * 1024 * 1024,  # headroom for double-buffered tiles
        ),
    )(slab)

    # Tiny epilogue in JAX: collapse partials, mean, reciprocal.
    total = jnp.sum(partials)
    mean_abs = total / jnp.float32(n_elements)
    return 1.0 / mean_abs


if __name__ == "__main__":
    key = jax.random.PRNGKey(0)
    x = jax.random.uniform(key, (2, 4, 16, 16), dtype=jnp.float32)  # NCHW

    result = gray_loss(x)
    jax.block_until_ready(result)

    # Reference check in plain JAX.
    ref = 1.0 / jnp.mean(jnp.abs(x - 0.5))
    assert jnp.allclose(result, ref, rtol=1e-5, atol=1e-5), (result, ref)

    print("KERNEL_OK")
</pallas_src>

<mosaic_0001>
module attributes {stable_mosaic.version = 11 : i64} {
  func.func @_grayloss_partial_kernel(%arg0: i32, %arg1: memref<16x128xf32, #tpu.memory_space<vmem>>, %arg2: memref<8x128xf32, #tpu.memory_space<vmem>>) attributes {dimension_semantics = [#tpu.dimension_semantics<parallel>], iteration_bounds = array<i64: 1>, scalar_prefetch = 0 : i64, scratch_operands = 0 : i64, tpu.core_type = #tpu.core_type<tc>, window_params = [{transform_indices = @transform_0, window_bounds = array<i64: 16, 128>}, {transform_indices = @transform_1, window_bounds = array<i64: 8, 128>}]} {
    %c0 = arith.constant 0 : index
    %c0_0 = arith.constant 0 : index
    %0 = vector.load %arg1[%c0, %c0_0] : memref<16x128xf32, #tpu.memory_space<vmem>>, vector<16x128xf32>
    %cst = arith.constant 5.000000e-01 : f32
    %1 = vector.broadcast %cst : f32 to vector<16x128xf32>
    %2 = arith.subf %0, %1 : vector<16x128xf32>
    %3 = math.absf %2 : vector<16x128xf32>
    %4 = vector.shape_cast %3 : vector<16x128xf32> to vector<2x8x128xf32>
    %cst_1 = arith.constant dense<0.000000e+00> : vector<8x128xf32>
    %5 = vector.multi_reduction <add>, %4, %cst_1 [0] : vector<2x8x128xf32> to vector<8x128xf32>
    %c0_2 = arith.constant 0 : index
    %c0_3 = arith.constant 0 : index
    %6 = vector.load %arg2[%c0_2, %c0_3] : memref<8x128xf32, #tpu.memory_space<vmem>>, vector<8x128xf32>
    tpu.vector_store %arg2[%c0_2, %c0_3], %5 {strides = array<i32>} : memref<8x128xf32, #tpu.memory_space<vmem>>, vector<8x128xf32>,
    return
  }
  func.func @transform_0(%arg0: i32) -> (i32, i32) {
    %c0_i32 = arith.constant 0 : i32
    %c0_i32_0 = arith.constant 0 : i32
    return %arg0, %c0_i32 : i32, i32
  }
  func.func @transform_1(%arg0: i32) -> (i32, i32) {
    %c0_i32 = arith.constant 0 : i32
    %c0_i32_0 = arith.constant 0 : i32
    return %arg0, %c0_i32 : i32, i32
  }
}

</mosaic_0001>

<llo_original>
// kernel: tpu_custom_call.1
$region0: #{tpu_custom_call.1}
  #allocation0 [shape = 'u32[]', space=smem, size = 0x4, offset = 0x4, fixed_abs, tag = 'smem constant byte address 0x4 - core index']
  #allocation1 [shape = 'u32[144,128]{1,0:T(1,128)}', space=vmem, size = 0x12000, scoped, tag = 'internal scratch']
  %s0 = inlined_call_operand.hbm [shape: f32[16,128], index: 0, kind: input, shape index: {}]
  %s1 = inlined_call_operand.hbm [shape: f32[8,128], index: 1, kind: output, shape index: {}]
  %s2 = sld [smem:[#allocation0]]
  $region18: #{tpu_custom_call.1} parent=0
    _
  %s4 = ssub.s32 1, %s2
  %s5 = scalar_select 0, %s4, %s2
  $region1: #{tpu_custom_call.1} parent=0
    #allocation2 [shape = 'u8[8192]{0}', space=vmem, size = 0x2000, scoped, tag = 'input window, operand 0, single buffered']
    #allocation3 [shape = 's32[1]{0}', space=sflag, size = 0x4, scoped, tag = 'scoped memory for tpu_custom_call.1']
    #allocation4 [shape = 's32[1]{0}', space=sflag, size = 0x4, scoped, tag = 'scoped memory for tpu_custom_call.1']
    #allocation5 [shape = 'u8[4096]{0}', space=vmem, size = 0x1000, scoped, tag = 'output window, operand 0, single buffered']
    %6 = vsyncpa [#allocation3], 0
    %7 = vsyncpa [#allocation4], 0
    // Predicated region
    $region2: #{tpu_custom_call.1} parent=1 // pred_check
      _
    $region3: #{tpu_custom_call.1} parent=1 // pred_check_branch
      %9 = sbr.rel (0) target = $region5
    $region4: #{tpu_custom_call.1} parent=1 // pred_region
      %s11 = ssub.s32 256, 256
      %12 = vsyncadd [#allocation3], %s11
      %s13 = sshll.u32 [#allocation2], 4
      %s14 = int_to_ptr.vmem [resolvable:$true] %s13
      %19 = dma.hbm_to_vmem [thread:$0]  %s0, 256, %s14, [#allocation3], 128, 128, 8
    $region5: #{tpu_custom_call.1} parent=1 // pred_fallthru
      _
    // Predicated region
    $region6: #{tpu_custom_call.1} parent=1 // pred_check
      _
    $region7: #{tpu_custom_call.1} parent=1 // pred_check_branch
      %21 = sbr.rel (0) target = $region9
    $region8: #{tpu_custom_call.1} parent=1 // pred_region
      %22 = dma.done [#allocation3], 256
    $region9: #{tpu_custom_call.1} parent=1 // pred_fallthru
      _
    %v23 = vld [vmem:[#allocation2] sm:$0xff]
    %v24 = vld [vmem:[#allocation2 + $0x8] sm:$0xff]
    %v25 = vsub.f32 %v23, 0.5
    %v26 = vsub.f32 %v24, 0.5
    %v27 = vand.u32 2147483647, %v25
    %v28 = vand.u32 2147483647, %v26
    %v29 = vadd.f32 %v27, %v28
    %30 = vst [vmem:[#allocation5] sm:$0xff] %v29
    // Predicated region
    $region10: #{tpu_custom_call.1} parent=1 // pred_check
      _
    $region11: #{tpu_custom_call.1} parent=1 // pred_check_branch
      %32 = sbr.rel (0) target = $region13
    $region12: #{tpu_custom_call.1} parent=1 // pred_region
      %s34 = ssub.s32 128, 128
      %35 = vsyncadd [#allocation4], %s34
      %s37 = sshll.u32 [#allocation5], 4
      %s38 = int_to_ptr.vmem [resolvable:$true] %s37
      %40 = dma.vmem_to_hbm [thread:$0]  %s38, 128, %s1, [#allocation4]
    $region13: #{tpu_custom_call.1} parent=1 // pred_fallthru
      _
    // Predicated region
    $region14: #{tpu_custom_call.1} parent=1 // pred_check
      _
    $region15: #{tpu_custom_call.1} parent=1 // pred_check_branch
      %42 = sbr.rel (0) target = $region17
    $region16: #{tpu_custom_call.1} parent=1 // pred_region
      %43 = dma.done [#allocation4], 128
    $region17: #{tpu_custom_call.1} parent=1 // pred_fallthru
      _
    %44 = vsyncpa [#allocation3], 1
    %45 = vsyncpa [#allocation4], 1

</llo_original>
